<compile_context>
chip_gen: v7x
topology: tpu7x:2x2x1
jax: 0.10.0
libtpu: 0.0.40
codegen_flags: <defaults>
</compile_context>

<pallas_src>
import jax
import jax.numpy as jnp
from jax.experimental import pallas as pl
from jax.experimental.pallas import tpu as pltpu

CW = 512  # lanes (samples) per inner compute chunk


# Packed-parameter slab, shape (32, 256) float32:
#   lane band 0 (cols 0:128):
#     rows 0:24, cols 0:32 -> W2^T (24, 32)
#     rows 0:32, col 32    -> w1 column ; col 33 -> b1 column
#     rows 0:24, col 34    -> b2 column
#     rows 0:12, col 35    -> b3 column ; col 36 -> w4 column
#     row  0,    col 37    -> b4 scalar
#   lane band 1 (cols 128:256):
#     rows 0:12, cols 128:152 -> W3^T (12, 24)
def pack_params(params):
    w1, b1, w2, b2, w3, b3, w4, b4 = params
    p = jnp.zeros((32, 256), jnp.float32)
    p = p.at[0:24, 0:32].set(w2.T)
    p = p.at[0:32, 32].set(w1[0, :])
    p = p.at[0:32, 33].set(b1)
    p = p.at[0:24, 34].set(b2)
    p = p.at[0:12, 35].set(b3)
    p = p.at[0:12, 36].set(w4[:, 0])
    p = p.at[0, 37].set(b4[0])
    p = p.at[0:12, 128:152].set(w3.T)
    return p


def _sigmoid(z):
    # tanh form: single EUP transcendental, no full-precision VPU divide.
    return 0.5 * jnp.tanh(0.5 * z) + 0.5


def _make_kernel(cps):
    def mlp_kernel(x_ref, p_ref, o_ref):
        # Hoisted parameter reads: once per grid step, reused by every chunk.
        w1c = p_ref[0:32, 32:33]        # (32, 1)
        b1c = p_ref[0:32, 33:34]        # (32, 1)
        w2t = p_ref[0:24, 0:32]         # (24, 32)
        b2c = p_ref[0:24, 34:35]        # (24, 1)
        w3t = p_ref[0:12, 128:152]      # (12, 24)
        b3c = p_ref[0:12, 35:36]        # (12, 1)
        w4c = p_ref[0:12, 36:37]        # (12, 1)
        b4 = p_ref[0:1, 37:38]          # (1, 1)

        # Fully-unrolled chunk loop: 512 batch lanes per chunk, activations
        # (32/24/12, 512) stay vreg-resident within a chunk.
        for c in range(cps):
            sl = pl.ds(c * CW, CW)
            xc = x_ref[:, sl]                                    # (1, CW)
            # Layer 1: K=1 contraction == VPU broadcast outer product.
            h1 = _sigmoid(w1c * xc + b1c)                        # (32, CW)
            # Layers 2 & 3: lane-dense MXU matmuls.
            h2 = _sigmoid(
                jnp.dot(w2t, h1, preferred_element_type=jnp.float32) + b2c)  # (24, CW)
            h3 = _sigmoid(
                jnp.dot(w3t, h2, preferred_element_type=jnp.float32) + b3c)  # (12, CW)
            # Head: N=1 contraction == VPU multiply + XLU sublane reduce.
            out = jnp.sum(w4c * h3, axis=0, keepdims=True) + b4  # (1, CW)
            o_ref[:, sl] = out.astype(o_ref.dtype)

    return mlp_kernel


@jax.jit
def mlp_forward(x, packed):
    """x: (B, 1) float32  ->  (B, 1) float32 (same semantics as the torch net)."""
    B = x.shape[0]
    n_chunks = pl.cdiv(B, CW)
    if n_chunks <= 8:
        cps = n_chunks                       # single grid step covers the batch
    else:
        cps = min(16, pl.cdiv(n_chunks, 2))  # big steps, but keep grid >= 2 (megacore)
    TB = cps * CW
    B_pad = TB * pl.cdiv(B, TB)

    # Relayout: batch -> lanes, zero-padded to the tile boundary.
    xt = jnp.zeros((1, B_pad), jnp.float32).at[0, :B].set(x[:, 0])

    out = pl.pallas_call(
        _make_kernel(cps),
        out_shape=jax.ShapeDtypeStruct((1, B_pad), jnp.float32),
        grid_spec=pltpu.PrefetchScalarGridSpec(
            num_scalar_prefetch=0,
            grid=(B_pad // TB,),
            in_specs=[
                pl.BlockSpec((1, TB), lambda i: (0, i)),    # x tile (lane-dense)
                pl.BlockSpec((32, 256), lambda i: (0, 0)),  # full param slab
            ],
            out_specs=pl.BlockSpec((1, TB), lambda i: (0, i)),
        ),
        compiler_params=pltpu.CompilerParams(
            dimension_semantics=("parallel",)),
    )(xt, packed)

    return out[0:1, :B].T                    # back to (B, 1)


def init_params(key):
    ks = jax.random.split(key, 8)
    w1 = jax.random.normal(ks[0], (1, 32), jnp.float32)
    b1 = jax.random.normal(ks[1], (32,), jnp.float32)
    w2 = jax.random.normal(ks[2], (32, 24), jnp.float32)
    b2 = jax.random.normal(ks[3], (24,), jnp.float32)
    w3 = jax.random.normal(ks[4], (24, 12), jnp.float32)
    b3 = jax.random.normal(ks[5], (12,), jnp.float32)
    w4 = jax.random.normal(ks[6], (12, 1), jnp.float32)
    b4 = jax.random.normal(ks[7], (1,), jnp.float32)
    return (w1, b1, w2, b2, w3, b3, w4, b4)


def reference_forward(x, params):
    (w1, b1, w2, b2, w3, b3, w4, b4) = params
    h1 = jax.nn.sigmoid(x @ w1 + b1)
    h2 = jax.nn.sigmoid(h1 @ w2 + b2)
    h3 = jax.nn.sigmoid(h2 @ w3 + b3)
    return h3 @ w4 + b4


if __name__ == "__main__":
    key = jax.random.PRNGKey(0)
    pkey, k1, k2, k3 = jax.random.split(key, 4)
    params = init_params(pkey)
    packed = pack_params(params)

    # Small batch: single 512-lane chunk, grid=(1,).
    x = jax.random.normal(k1, (8, 1), jnp.float32)
    out = jax.block_until_ready(mlp_forward(x, packed))
    ref = jax.block_until_ready(reference_forward(x, params))
    assert out.shape == (8, 1)
    assert jnp.allclose(out, ref, atol=1e-4, rtol=1e-4)

    # Medium batch: one grid step, 2 inner chunks, with padding.
    x2 = jax.random.normal(k2, (1000, 1), jnp.float32)
    out2 = jax.block_until_ready(mlp_forward(x2, packed))
    ref2 = jax.block_until_ready(reference_forward(x2, params))
    assert out2.shape == (1000, 1)
    assert jnp.allclose(out2, ref2, atol=1e-4, rtol=1e-4)

    # Larger batch: exercises grid=(2,) (parallel axis) and 9 chunks per step.
    x3 = jax.random.normal(k3, (9000, 1), jnp.float32)
    out3 = jax.block_until_ready(mlp_forward(x3, packed))
    ref3 = jax.block_until_ready(reference_forward(x3, params))
    assert out3.shape == (9000, 1)
    assert jnp.allclose(out3, ref3, atol=1e-4, rtol=1e-4)

    print("KERNEL_OK")
</pallas_src>

<mosaic_0001>
module attributes {stable_mosaic.version = 11 : i64} {
  func.func @mlp_kernel(%arg0: i32, %arg1: memref<1x512xf32, #tpu.memory_space<vmem>>, %arg2: memref<32x256xf32, #tpu.memory_space<vmem>>, %arg3: memref<1x512xf32, #tpu.memory_space<vmem>>) attributes {dimension_semantics = [#tpu.dimension_semantics<parallel>], iteration_bounds = array<i64: 1>, scalar_prefetch = 0 : i64, scratch_operands = 0 : i64, tpu.core_type = #tpu.core_type<tc>, window_params = [{transform_indices = @transform_0, window_bounds = array<i64: 1, 512>}, {pipeline_mode = #tpu.pipeline_mode<synchronous>, transform_indices = @transform_1, window_bounds = array<i64: 32, 256>}, {transform_indices = @transform_2, window_bounds = array<i64: 1, 512>}]} {
    %c0 = arith.constant 0 : index
    %c32 = arith.constant 32 : index
    %0 = vector.load %arg2[%c0, %c32] : memref<32x256xf32, #tpu.memory_space<vmem>>, vector<32x1xf32>
    %c0_0 = arith.constant 0 : index
    %c33 = arith.constant 33 : index
    %1 = vector.load %arg2[%c0_0, %c33] : memref<32x256xf32, #tpu.memory_space<vmem>>, vector<32x1xf32>
    %c0_1 = arith.constant 0 : index
    %c0_2 = arith.constant 0 : index
    %2 = vector.load %arg2[%c0_1, %c0_2] : memref<32x256xf32, #tpu.memory_space<vmem>>, vector<24x32xf32>
    %c0_3 = arith.constant 0 : index
    %c34 = arith.constant 34 : index
    %3 = vector.load %arg2[%c0_3, %c34] : memref<32x256xf32, #tpu.memory_space<vmem>>, vector<24x1xf32>
    %c0_4 = arith.constant 0 : index
    %c128 = arith.constant 128 : index
    %4 = vector.load %arg2[%c0_4, %c128] : memref<32x256xf32, #tpu.memory_space<vmem>>, vector<12x24xf32>
    %c0_5 = arith.constant 0 : index
    %c35 = arith.constant 35 : index
    %5 = vector.load %arg2[%c0_5, %c35] : memref<32x256xf32, #tpu.memory_space<vmem>>, vector<12x1xf32>
    %c0_6 = arith.constant 0 : index
    %c36 = arith.constant 36 : index
    %6 = vector.load %arg2[%c0_6, %c36] : memref<32x256xf32, #tpu.memory_space<vmem>>, vector<12x1xf32>
    %c0_7 = arith.constant 0 : index
    %c37 = arith.constant 37 : index
    %7 = vector.load %arg2[%c0_7, %c37] : memref<32x256xf32, #tpu.memory_space<vmem>>, vector<1x1xf32>
    %c0_8 = arith.constant 0 : index
    %c0_9 = arith.constant 0 : index
    %8 = vector.load %arg1[%c0_8, %c0_9] : memref<1x512xf32, #tpu.memory_space<vmem>>, vector<1x512xf32>
    %9 = vector.broadcast %0 : vector<32x1xf32> to vector<32x512xf32>
    %10 = vector.broadcast %8 : vector<1x512xf32> to vector<32x512xf32>
    %11 = arith.mulf %9, %10 : vector<32x512xf32>
    %12 = vector.broadcast %1 : vector<32x1xf32> to vector<32x512xf32>
    %13 = arith.addf %11, %12 : vector<32x512xf32>
    %cst = arith.constant 5.000000e-01 : f32
    %14 = vector.broadcast %cst : f32 to vector<32x512xf32>
    %15 = arith.mulf %14, %13 : vector<32x512xf32>
    %16 = math.tanh %15 : vector<32x512xf32>
    %cst_10 = arith.constant 5.000000e-01 : f32
    %17 = vector.broadcast %cst_10 : f32 to vector<32x512xf32>
    %18 = arith.mulf %17, %16 : vector<32x512xf32>
    %cst_11 = arith.constant 5.000000e-01 : f32
    %19 = vector.broadcast %cst_11 : f32 to vector<32x512xf32>
    %20 = arith.addf %18, %19 : vector<32x512xf32>
    %cst_12 = arith.constant dense<0.000000e+00> : vector<24x512xf32>
    %21 = tpu.matmul %2, %20, %cst_12 {dimension_numbers = #tpu.dot_dimension_numbers<[1], [0], [0], [1], [0, 0, 1, 1], [], []>} : vector<24x32xf32>, vector<32x512xf32>, vector<24x512xf32> -> vector<24x512xf32>
    %22 = vector.broadcast %3 : vector<24x1xf32> to vector<24x512xf32>
    %23 = arith.addf %21, %22 : vector<24x512xf32>
    %cst_13 = arith.constant 5.000000e-01 : f32
    %24 = vector.broadcast %cst_13 : f32 to vector<24x512xf32>
    %25 = arith.mulf %24, %23 : vector<24x512xf32>
    %26 = math.tanh %25 : vector<24x512xf32>
    %cst_14 = arith.constant 5.000000e-01 : f32
    %27 = vector.broadcast %cst_14 : f32 to vector<24x512xf32>
    %28 = arith.mulf %27, %26 : vector<24x512xf32>
    %cst_15 = arith.constant 5.000000e-01 : f32
    %29 = vector.broadcast %cst_15 : f32 to vector<24x512xf32>
    %30 = arith.addf %28, %29 : vector<24x512xf32>
    %cst_16 = arith.constant dense<0.000000e+00> : vector<12x512xf32>
    %31 = tpu.matmul %4, %30, %cst_16 {dimension_numbers = #tpu.dot_dimension_numbers<[1], [0], [0], [1], [0, 0, 1, 1], [], []>} : vector<12x24xf32>, vector<24x512xf32>, vector<12x512xf32> -> vector<12x512xf32>
    %32 = vector.broadcast %5 : vector<12x1xf32> to vector<12x512xf32>
    %33 = arith.addf %31, %32 : vector<12x512xf32>
    %cst_17 = arith.constant 5.000000e-01 : f32
    %34 = vector.broadcast %cst_17 : f32 to vector<12x512xf32>
    %35 = arith.mulf %34, %33 : vector<12x512xf32>
    %36 = math.tanh %35 : vector<12x512xf32>
    %cst_18 = arith.constant 5.000000e-01 : f32
    %37 = vector.broadcast %cst_18 : f32 to vector<12x512xf32>
    %38 = arith.mulf %37, %36 : vector<12x512xf32>
    %cst_19 = arith.constant 5.000000e-01 : f32
    %39 = vector.broadcast %cst_19 : f32 to vector<12x512xf32>
    %40 = arith.addf %38, %39 : vector<12x512xf32>
    %41 = vector.broadcast %6 : vector<12x1xf32> to vector<12x512xf32>
    %42 = arith.mulf %41, %40 : vector<12x512xf32>
    %cst_20 = arith.constant dense<0.000000e+00> : vector<512xf32>
    %43 = vector.multi_reduction <add>, %42, %cst_20 [0] : vector<12x512xf32> to vector<512xf32>
    %44 = vector.shape_cast %43 : vector<512xf32> to vector<1x512xf32>
    %45 = vector.broadcast %7 : vector<1x1xf32> to vector<1x512xf32>
    %46 = arith.addf %44, %45 : vector<1x512xf32>
    %c0_21 = arith.constant 0 : index
    %c0_22 = arith.constant 0 : index
    %47 = vector.load %arg3[%c0_21, %c0_22] : memref<1x512xf32, #tpu.memory_space<vmem>>, vector<1x512xf32>
    tpu.vector_store %arg3[%c0_21, %c0_22], %46 {strides = array<i32>} : memref<1x512xf32, #tpu.memory_space<vmem>>, vector<1x512xf32>,
    return
  }
  func.func @transform_0(%arg0: i32) -> (i32, i32) {
    %c0_i32 = arith.constant 0 : i32
    %c0_i32_0 = arith.constant 0 : i32
    return %c0_i32, %arg0 : i32, i32
  }
  func.func @transform_1(%arg0: i32) -> (i32, i32) {
    %c0_i32 = arith.constant 0 : i32
    %c0_i32_0 = arith.constant 0 : i32
    %c0_i32_1 = arith.constant 0 : i32
    return %c0_i32, %c0_i32_0 : i32, i32
  }
  func.func @transform_2(%arg0: i32) -> (i32, i32) {
    %c0_i32 = arith.constant 0 : i32
    %c0_i32_0 = arith.constant 0 : i32
    return %c0_i32, %arg0 : i32, i32
  }
}

</mosaic_0001>

<llo_original>
// kernel: mlp_forward.1
$region0: #{mlp_forward.1}
  #allocation0 [shape = 'u32[]', space=smem, size = 0x4, offset = 0x4, fixed_abs, tag = 'smem constant byte address 0x4 - core index']
  #allocation1 [shape = 'u32[144,128]{1,0:T(1,128)}', space=vmem, size = 0x12000, scoped, tag = 'internal scratch']
  %s0 = inlined_call_operand.vmem [shape: f32[1,512], index: 0, kind: input, shape index: {}]
  %s1 = inlined_call_operand.hbm [shape: f32[32,256], index: 1, kind: input, shape index: {}]
  %s2 = inlined_call_operand.vmem [shape: f32[1,512], index: 2, kind: output, shape index: {}]
  %s3 = sld [smem:[#allocation0]]
  $region22: #{mlp_forward.1} parent=0
    _
  %s5 = ssub.s32 1, %s3
  %s6 = scalar_select 0, %s5, %s3
  $region1: #{mlp_forward.1} parent=0
    #allocation2 [shape = 'u8[32768]{0}', space=vmem, size = 0x8000, scoped, tag = 'input window, operand 1, single buffered']
    #allocation3 [shape = 's32[1]{0}', space=sflag, size = 0x4, scoped, tag = 'scoped memory for mlp_forward.1']
    %7 = vsyncpa [#allocation3], 0
    // Predicated region
    $region2: #{mlp_forward.1} parent=1 // pred_check
      _
    $region3: #{mlp_forward.1} parent=1 // pred_check_branch
      %9 = sbr.rel (0) target = $region5
    $region4: #{mlp_forward.1} parent=1 // pred_region
      _
    $region5: #{mlp_forward.1} parent=1 // pred_fallthru
      _
    // Predicated region
    $region6: #{mlp_forward.1} parent=1 // pred_check
      _
    $region7: #{mlp_forward.1} parent=1 // pred_check_branch
      %11 = sbr.rel (0) target = $region9
    $region8: #{mlp_forward.1} parent=1 // pred_region
      %s13 = ssub.s32 1024, 1024
      %14 = vsyncadd [#allocation3], %s13
      %s15 = sshll.u32 [#allocation2], 4
      %s16 = int_to_ptr.vmem [resolvable:$true] %s15
      %21 = dma.hbm_to_vmem [thread:$0]  %s1, 1024, %s16, [#allocation3], 256, 256, 16
    $region9: #{mlp_forward.1} parent=1 // pred_fallthru
      _
    // Predicated region
    $region10: #{mlp_forward.1} parent=1 // pred_check
      _
    $region11: #{mlp_forward.1} parent=1 // pred_check_branch
      %23 = sbr.rel (0) target = $region13
    $region12: #{mlp_forward.1} parent=1 // pred_region
      %24 = dma.done [#allocation3], 1024
    $region13: #{mlp_forward.1} parent=1 // pred_fallthru
      _
    %v25 = vld [vmem:[#allocation2] sm:$0xff]
    %v26 = vld [vmem:[#allocation2 + $0x10] sm:$0xff]
    %v27 = vld [vmem:[#allocation2 + $0x20] sm:$0xff]
    %v28 = vld [vmem:[#allocation2 + $0x30] sm:$0xff]
    %v29 = vld [vmem:[#allocation2 + $0x8] sm:$0xff]
    %v30 = vld [vmem:[#allocation2 + $0x18] sm:$0xf]
    %v31 = vld [vmem:[#allocation2 + $0x10] sm:$0xf]
    %v32 = vld [vmem:[#allocation2] ss:$0 sm:$0xff]
    %v33 = vld [vmem:[%s0] sm:$0xf]
    %35 = vset.pattern.permute.xlu0 32
    %36 = vperm.xlu0 %35, %v25
    %v37 = vpop.permute.xlu0 %36
    %40 = vset.pattern.permute.xlu0 32
    %41 = vperm.xlu0 %40, %v26
    %v42 = vpop.permute.xlu0 %41
    %45 = vset.pattern.permute.xlu0 32
    %46 = vperm.xlu0 %45, %v27
    %v47 = vpop.permute.xlu0 %46
    %50 = vset.pattern.permute.xlu0 32
    %51 = vperm.xlu0 %50, %v28
    %v52 = vpop.permute.xlu0 %51
    %v55 = vlaneseq
    %v56 = vshrl.u32 %v55, 7
    %v57 = vsub.s32 0, %v56
    %v58 = vrot.slane %v33, %v57
    %v59 = vlaneseq
    %v60 = vshrl.u32 %v59, 7
    %v61 = vsub.s32 1, %v60
    %v62 = vrot.slane %v33, %v61
    %v63 = vlaneseq
    %v64 = vshrl.u32 %v63, 7
    %v65 = vsub.s32 2, %v64
    %v66 = vrot.slane %v33, %v65
    %v67 = vlaneseq
    %v68 = vshrl.u32 %v67, 7
    %v69 = vsub.s32 3, %v68
    %v70 = vrot.slane %v33, %v69
    %v75 = vmul.f32 %v37, %v58
    %v76 = vmul.f32 %v37, %v62
    %v77 = vmul.f32 %v37, %v66
    %v78 = vmul.f32 %v37, %v70
    %v79 = vmul.f32 %v42, %v58
    %v80 = vmul.f32 %v42, %v62
    %v81 = vmul.f32 %v42, %v66
    %v82 = vmul.f32 %v42, %v70
    %v83 = vmul.f32 %v47, %v58
    %v84 = vmul.f32 %v47, %v62
    %v85 = vmul.f32 %v47, %v66
    %v86 = vmul.f32 %v47, %v70
    %v87 = vmul.f32 %v52, %v58
    %v88 = vmul.f32 %v52, %v62
    %v89 = vmul.f32 %v52, %v66
    %v90 = vmul.f32 %v52, %v70
    %91 = vset.pattern.permute.xlu0 33
    %92 = vperm.xlu0 %91, %v25
    %v93 = vpop.permute.xlu0 %92
    %95 = vset.pattern.permute.xlu0 33
    %96 = vperm.xlu0 %95, %v26
    %v97 = vpop.permute.xlu0 %96
    %99 = vset.pattern.permute.xlu0 33
    %100 = vperm.xlu0 %99, %v27
    %v101 = vpop.permute.xlu0 %100
    %103 = vset.pattern.permute.xlu0 33
    %104 = vperm.xlu0 %103, %v28
    %v105 = vpop.permute.xlu0 %104
    %v107 = vadd.f32 %v75, %v93
    %v108 = vadd.f32 %v76, %v93
    %v109 = vadd.f32 %v77, %v93
    %v110 = vadd.f32 %v78, %v93
    %v111 = vadd.f32 %v79, %v97
    %v112 = vadd.f32 %v80, %v97
    %v113 = vadd.f32 %v81, %v97
    %v114 = vadd.f32 %v82, %v97
    %v115 = vadd.f32 %v83, %v101
    %v116 = vadd.f32 %v84, %v101
    %v117 = vadd.f32 %v85, %v101
    %v118 = vadd.f32 %v86, %v101
    %v119 = vadd.f32 %v87, %v105
    %v120 = vadd.f32 %v88, %v105
    %v121 = vadd.f32 %v89, %v105
    %v122 = vadd.f32 %v90, %v105
    %v123 = vmul.f32 %v107, 0.5
    %v124 = vmul.f32 %v108, 0.5
    %v125 = vmul.f32 %v109, 0.5
    %v126 = vmul.f32 %v110, 0.5
    %v127 = vmul.f32 %v111, 0.5
    %v128 = vmul.f32 %v112, 0.5
    %v129 = vmul.f32 %v113, 0.5
    %v130 = vmul.f32 %v114, 0.5
    %v131 = vmul.f32 %v115, 0.5
    %v132 = vmul.f32 %v116, 0.5
    %v133 = vmul.f32 %v117, 0.5
    %v134 = vmul.f32 %v118, 0.5
    %v135 = vmul.f32 %v119, 0.5
    %v136 = vmul.f32 %v120, 0.5
    %v137 = vmul.f32 %v121, 0.5
    %v138 = vmul.f32 %v122, 0.5
    %v139 = vtanh.pop %v123
    %v140 = vtanh.pop %v124
    %v141 = vtanh.pop %v125
    %v142 = vtanh.pop %v126
    %v143 = vtanh.pop %v127
    %v144 = vtanh.pop %v128
    %v145 = vtanh.pop %v129
    %v146 = vtanh.pop %v130
    %v147 = vtanh.pop %v131
    %v148 = vtanh.pop %v132
    %v149 = vtanh.pop %v133
    %v150 = vtanh.pop %v134
    %v151 = vtanh.pop %v135
    %v152 = vtanh.pop %v136
    %v153 = vtanh.pop %v137
    %v154 = vtanh.pop %v138
    %v155 = vmul.f32 %v139, 0.5
    %v156 = vmul.f32 %v140, 0.5
    %v157 = vmul.f32 %v141, 0.5
    %v158 = vmul.f32 %v142, 0.5
    %v159 = vmul.f32 %v143, 0.5
    %v160 = vmul.f32 %v144, 0.5
    %v161 = vmul.f32 %v145, 0.5
    %v162 = vmul.f32 %v146, 0.5
    %v163 = vmul.f32 %v147, 0.5
    %v164 = vmul.f32 %v148, 0.5
    %v165 = vmul.f32 %v149, 0.5
    %v166 = vmul.f32 %v150, 0.5
    %v167 = vmul.f32 %v151, 0.5
    %v168 = vmul.f32 %v152, 0.5
    %v169 = vmul.f32 %v153, 0.5
    %v170 = vmul.f32 %v154, 0.5
    %v171 = vadd.f32 %v155, 0.5
    %v172 = vadd.f32 %v156, 0.5
    %v173 = vadd.f32 %v157, 0.5
    %v174 = vadd.f32 %v158, 0.5
    %v175 = vadd.f32 %v159, 0.5
    %v176 = vadd.f32 %v160, 0.5
    %v177 = vadd.f32 %v161, 0.5
    %v178 = vadd.f32 %v162, 0.5
    %v179 = vadd.f32 %v163, 0.5
    %v180 = vadd.f32 %v164, 0.5
    %v181 = vadd.f32 %v165, 0.5
    %v182 = vadd.f32 %v166, 0.5
    %v183 = vadd.f32 %v167, 0.5
    %v184 = vadd.f32 %v168, 0.5
    %v185 = vadd.f32 %v169, 0.5
    %v186 = vadd.f32 %v170, 0.5
    %187 = vset.pattern.permute.xlu0 34
    %188 = vperm.xlu0 %187, %v25
    %v189 = vpop.permute.xlu0 %188
    %191 = vset.pattern.permute.xlu0 34
    %192 = vperm.xlu0 %191, %v26
    %v193 = vpop.permute.xlu0 %192
    %195 = vset.pattern.permute.xlu0 34
    %196 = vperm.xlu0 %195, %v27
    %v197 = vpop.permute.xlu0 %196
    %vm199 = vcmask 261120
    %v200 = vsel %vm199, %v25, 0
    %v202 = vsel %vm199, %v26, 0
    %v204 = vsel %vm199, %v27, 0
    %206 = vmatprep.subr.mxu0 %v172
    %207 = vmatpush1.msra.mxu0 %v171
    %208 = vmatprep.subr.mxu0 %v176
    %209 = vmatpush1.msra.mxu0 %v175
    %210 = vmatprep.subr.mxu0 %v180
    %211 = vmatpush1.msra.mxu0 %v179
    %212 = vmatprep.subr.mxu0 %v184
    %213 = vmatpush1.msra.mxu0 %v183
    %214 = vmatprep.subr.mxu0 0.0
    %215 = vmatpush1.msra.mxu0 0.0
    %216 = vmatprep.subr.mxu0 0.0
    %217 = vmatpush1.msra.mxu0 0.0
    %218 = vmatprep.subr.mxu0 0.0
    %219 = vmatpush1.msra.mxu0 0.0
    %220 = vmatprep.subr.mxu0 0.0
    %221 = vmatpush1.msra.mxu0 0.0
    %222 = vmatprep.subr.mxu0 0.0
    %223 = vmatpush1.msra.mxu0 0.0
    %224 = vmatprep.subr.mxu0 0.0
    %225 = vmatpush1.msra.mxu0 0.0
    %226 = vmatprep.subr.mxu0 0.0
    %227 = vmatpush1.msra.mxu0 0.0
    %228 = vmatprep.subr.mxu0 0.0
    %229 = vmatpush1.msra.mxu0 0.0
    %230 = vmatprep.subr.mxu0 0.0
    %231 = vmatpush1.msra.mxu0 0.0
    %232 = vmatprep.subr.mxu0 0.0
    %233 = vmatpush1.msra.mxu0 0.0
    %234 = vmatprep.subr.mxu0 0.0
    %235 = vmatpush1.msra.mxu0 0.0
    %236 = vmatprep.subr.mxu0 0.0
    %237 = vmatpush1.msra.mxu0 0.0
    %238 = vmatprep.subr.mxu0 0.0
    %239 = vmatpush1.msra.mxu0 0.0
    %240 = vmatprep.subr.mxu0 0.0
    %241 = vmatpush1.msra.mxu0 0.0
    %242 = vmatprep.subr.mxu0 0.0
    %243 = vmatpush1.msra.mxu0 0.0
    %244 = vmatprep.subr.mxu0 0.0
    %245 = vmatpush1.msra.mxu0 0.0
    %246 = vmatprep.subr.mxu0 0.0
    %247 = vmatpush1.msra.mxu0 0.0
    %248 = vmatprep.subr.mxu0 0.0
    %249 = vmatpush1.msra.mxu0 0.0
    %250 = vmatprep.subr.mxu0 0.0
    %251 = vmatpush1.msra.mxu0 0.0
    %252 = vmatprep.subr.mxu0 0.0
    %253 = vmatpush1.msra.mxu0 0.0
    %254 = vmatprep.subr.mxu0 0.0
    %255 = vmatpush1.msra.mxu0 0.0
    %256 = vmatprep.subr.mxu0 0.0
    %257 = vmatpush1.msra.mxu0 0.0
    %258 = vmatprep.subr.mxu0 0.0
    %259 = vmatpush1.msra.mxu0 0.0
    %260 = vmatprep.subr.mxu0 0.0
    %261 = vmatpush1.msra.mxu0 0.0
    %262 = vmatprep.subr.mxu0 0.0
    %263 = vmatpush1.msra.mxu0 0.0
    %264 = vmatprep.subr.mxu0 0.0
    %265 = vmatpush1.msra.mxu0 0.0
    %266 = vmatprep.subr.mxu0 0.0
    %267 = vmatpush1.msra.mxu0 0.0
    %268 = vmatprep.subr.mxu0 0.0
    %269 = vmatpush1.msra.mxu0 0.0
    %270 = vmatprep.mubr.f32.mxu0 0.0
    %271 = vmatmul.mubr.f32.gmra.mrb[0].mxu0 %v200
    %v272 = vpop.f32.mrb[0].mxu0
    %v273 = vadd.f32 %v189, %v272
    %v274 = vpop.f32.mrb[0].mxu0
    %v275 = vadd.f32 %v189, %v274
    %276 = vmatprep.mubr.f32.mxu0 0.0
    %277 = vmatmul.mubr.f32.gmra.mrb[0].mxu0 %v202
    %v278 = vpop.f32.mrb[0].mxu0
    %v279 = vadd.f32 %v193, %v278
    %v280 = vpop.f32.mrb[0].mxu0
    %v281 = vadd.f32 %v193, %v280
    %282 = vmatprep.mubr.f32.mxu0 0.0
    %283 = vmatmul.mubr.f32.gmra.mrb[0].mxu0 %v204
    %v284 = vpop.f32.mrb[0].mxu0
    %v285 = vadd.f32 %v197, %v284
    %v286 = vpop.f32.mrb[0].mxu0
    %v287 = vadd.f32 %v197, %v286
    %288 = vdwg.mxu0
    %289 = vmatprep.subr.mxu0 %v174
    %290 = vmatpush1.msra.mxu0 %v173
    %291 = vmatprep.subr.mxu0 %v178
    %292 = vmatpush1.msra.mxu0 %v177
    %293 = vmatprep.subr.mxu0 %v182
    %294 = vmatpush1.msra.mxu0 %v181
    %295 = vmatprep.subr.mxu0 %v186
    %296 = vmatpush1.msra.mxu0 %v185
    %297 = vmatprep.subr.mxu0 0.0
    %298 = vmatpush1.msra.mxu0 0.0
    %299 = vmatprep.subr.mxu0 0.0
    %300 = vmatpush1.msra.mxu0 0.0
    %301 = vmatprep.subr.mxu0 0.0
    %302 = vmatpush1.msra.mxu0 0.0
    %303 = vmatprep.subr.mxu0 0.0
    %304 = vmatpush1.msra.mxu0 0.0
    %305 = vmatprep.subr.mxu0 0.0
    %306 = vmatpush1.msra.mxu0 0.0
    %307 = vmatprep.subr.mxu0 0.0
    %308 = vmatpush1.msra.mxu0 0.0
    %309 = vmatprep.subr.mxu0 0.0
    %310 = vmatpush1.msra.mxu0 0.0
    %311 = vmatprep.subr.mxu0 0.0
    %312 = vmatpush1.msra.mxu0 0.0
    %313 = vmatprep.subr.mxu0 0.0
    %314 = vmatpush1.msra.mxu0 0.0
    %315 = vmatprep.subr.mxu0 0.0
    %316 = vmatpush1.msra.mxu0 0.0
    %317 = vmatprep.subr.mxu0 0.0
    %318 = vmatpush1.msra.mxu0 0.0
    %319 = vmatprep.subr.mxu0 0.0
    %320 = vmatpush1.msra.mxu0 0.0
    %321 = vmatprep.subr.mxu0 0.0
    %322 = vmatpush1.msra.mxu0 0.0
    %323 = vmatprep.subr.mxu0 0.0
    %324 = vmatpush1.msra.mxu0 0.0
    %325 = vmatprep.subr.mxu0 0.0
    %326 = vmatpush1.msra.mxu0 0.0
    %327 = vmatprep.subr.mxu0 0.0
    %328 = vmatpush1.msra.mxu0 0.0
    %329 = vmatprep.subr.mxu0 0.0
    %330 = vmatpush1.msra.mxu0 0.0
    %331 = vmatprep.subr.mxu0 0.0
    %332 = vmatpush1.msra.mxu0 0.0
    %333 = vmatprep.subr.mxu0 0.0
    %334 = vmatpush1.msra.mxu0 0.0
    %335 = vmatprep.subr.mxu0 0.0
    %336 = vmatpush1.msra.mxu0 0.0
    %337 = vmatprep.subr.mxu0 0.0
    %338 = vmatpush1.msra.mxu0 0.0
    %339 = vmatprep.subr.mxu0 0.0
    %340 = vmatpush1.msra.mxu0 0.0
    %341 = vmatprep.subr.mxu0 0.0
    %342 = vmatpush1.msra.mxu0 0.0
    %343 = vmatprep.subr.mxu0 0.0
    %344 = vmatpush1.msra.mxu0 0.0
    %345 = vmatprep.subr.mxu0 0.0
    %346 = vmatpush1.msra.mxu0 0.0
    %347 = vmatprep.subr.mxu0 0.0
    %348 = vmatpush1.msra.mxu0 0.0
    %349 = vmatprep.subr.mxu0 0.0
    %350 = vmatpush1.msra.mxu0 0.0
    %351 = vmatprep.subr.mxu0 0.0
    %352 = vmatpush1.msra.mxu0 0.0
    %353 = vmatprep.mubr.f32.mxu0 0.0
    %354 = vmatmul.mubr.f32.gmra.mrb[0].mxu0 %v200
    %v355 = vpop.f32.mrb[0].mxu0
    %v356 = vadd.f32 %v189, %v355
    %v357 = vpop.f32.mrb[0].mxu0
    %v358 = vadd.f32 %v189, %v357
    %359 = vmatprep.mubr.f32.mxu0 0.0
    %360 = vmatmul.mubr.f32.gmra.mrb[0].mxu0 %v202
    %v361 = vpop.f32.mrb[0].mxu0
    %v362 = vadd.f32 %v193, %v361
    %v363 = vpop.f32.mrb[0].mxu0
    %v364 = vadd.f32 %v193, %v363
    %365 = vmatprep.mubr.f32.mxu0 0.0
    %366 = vmatmul.mubr.f32.gmra.mrb[0].mxu0 %v204
    %v367 = vpop.f32.mrb[0].mxu0
    %v368 = vadd.f32 %v197, %v367
    %v369 = vpop.f32.mrb[0].mxu0
    %v370 = vadd.f32 %v197, %v369
    %371 = vdwg.mxu0
    %v372 = vmul.f32 %v273, 0.5
    %v373 = vmul.f32 %v275, 0.5
    %v374 = vmul.f32 %v356, 0.5
    %v375 = vmul.f32 %v358, 0.5
    %v376 = vmul.f32 %v279, 0.5
    %v377 = vmul.f32 %v281, 0.5
    %v378 = vmul.f32 %v362, 0.5
    %v379 = vmul.f32 %v364, 0.5
    %v380 = vmul.f32 %v285, 0.5
    %v381 = vmul.f32 %v287, 0.5
    %v382 = vmul.f32 %v368, 0.5
    %v383 = vmul.f32 %v370, 0.5
    %v384 = vtanh.pop %v372
    %v385 = vtanh.pop %v373
    %v386 = vtanh.pop %v374
    %v387 = vtanh.pop %v375
    %v388 = vtanh.pop %v376
    %v389 = vtanh.pop %v377
    %v390 = vtanh.pop %v378
    %v391 = vtanh.pop %v379
    %v392 = vtanh.pop %v380
    %v393 = vtanh.pop %v381
    %v394 = vtanh.pop %v382
    %v395 = vtanh.pop %v383
    %v396 = vmul.f32 %v384, 0.5
    %v397 = vmul.f32 %v385, 0.5
    %v398 = vmul.f32 %v386, 0.5
    %v399 = vmul.f32 %v387, 0.5
    %v400 = vmul.f32 %v388, 0.5
    %v401 = vmul.f32 %v389, 0.5
    %v402 = vmul.f32 %v390, 0.5
    %v403 = vmul.f32 %v391, 0.5
    %v404 = vmul.f32 %v392, 0.5
    %v405 = vmul.f32 %v393, 0.5
    %v406 = vmul.f32 %v394, 0.5
    %v407 = vmul.f32 %v395, 0.5
    %v408 = vadd.f32 %v396, 0.5
    %v409 = vadd.f32 %v397, 0.5
    %v410 = vadd.f32 %v398, 0.5
    %v411 = vadd.f32 %v399, 0.5
    %v412 = vadd.f32 %v400, 0.5
    %v413 = vadd.f32 %v401, 0.5
    %v414 = vadd.f32 %v402, 0.5
    %v415 = vadd.f32 %v403, 0.5
    %v416 = vadd.f32 %v404, 0.5
    %v417 = vadd.f32 %v405, 0.5
    %v418 = vadd.f32 %v406, 0.5
    %v419 = vadd.f32 %v407, 0.5
    %420 = vset.pattern.permute.xlu0 35
    %421 = vperm.xlu0 %420, %v25
    %v422 = vpop.permute.xlu0 %421
    %425 = vset.pattern.permute.xlu0 35
    %426 = vperm.xlu0 %425, %v31
    %v427 = vpop.permute.xlu0 %426
    %vm429 = vcmask 195584
    %v431 = vsel %vm429, %v29, 0
    %v434 = vsel %vm429, %v30, 0
    %436 = vmatprep.subr.mxu0 %v409
    %437 = vmatpush1.msra.mxu0 %v408
    %438 = vmatprep.subr.mxu0 %v413
    %439 = vmatpush1.msra.mxu0 %v412
    %440 = vmatprep.subr.mxu0 %v417
    %441 = vmatpush1.msra.mxu0 %v416
    %442 = vmatprep.subr.mxu0 0.0
    %443 = vmatpush1.msra.mxu0 0.0
    %444 = vmatprep.subr.mxu0 0.0
    %445 = vmatpush1.msra.mxu0 0.0
    %446 = vmatprep.subr.mxu0 0.0
    %447 = vmatpush1.msra.mxu0 0.0
    %448 = vmatprep.subr.mxu0 0.0
    %449 = vmatpush1.msra.mxu0 0.0
    %450 = vmatprep.subr.mxu0 0.0
    %451 = vmatpush1.msra.mxu0 0.0
    %452 = vmatprep.subr.mxu0 0.0
    %453 = vmatpush1.msra.mxu0 0.0
    %454 = vmatprep.subr.mxu0 0.0
    %455 = vmatpush1.msra.mxu0 0.0
    %456 = vmatprep.subr.mxu0 0.0
    %457 = vmatpush1.msra.mxu0 0.0
    %458 = vmatprep.subr.mxu0 0.0
    %459 = vmatpush1.msra.mxu0 0.0
    %460 = vmatprep.subr.mxu0 0.0
    %461 = vmatpush1.msra.mxu0 0.0
    %462 = vmatprep.subr.mxu0 0.0
    %463 = vmatpush1.msra.mxu0 0.0
    %464 = vmatprep.subr.mxu0 0.0
    %465 = vmatpush1.msra.mxu0 0.0
    %466 = vmatprep.subr.mxu0 0.0
    %467 = vmatpush1.msra.mxu0 0.0
    %468 = vmatprep.subr.mxu0 0.0
    %469 = vmatpush1.msra.mxu0 0.0
    %470 = vmatprep.subr.mxu0 0.0
    %471 = vmatpush1.msra.mxu0 0.0
    %472 = vmatprep.subr.mxu0 0.0
    %473 = vmatpush1.msra.mxu0 0.0
    %474 = vmatprep.subr.mxu0 0.0
    %475 = vmatpush1.msra.mxu0 0.0
    %476 = vmatprep.subr.mxu0 0.0
    %477 = vmatpush1.msra.mxu0 0.0
    %478 = vmatprep.subr.mxu0 0.0
    %479 = vmatpush1.msra.mxu0 0.0
    %480 = vmatprep.subr.mxu0 0.0
    %481 = vmatpush1.msra.mxu0 0.0
    %482 = vmatprep.subr.mxu0 0.0
    %483 = vmatpush1.msra.mxu0 0.0
    %484 = vmatprep.subr.mxu0 0.0
    %485 = vmatpush1.msra.mxu0 0.0
    %486 = vmatprep.subr.mxu0 0.0
    %487 = vmatpush1.msra.mxu0 0.0
    %488 = vmatprep.subr.mxu0 0.0
    %489 = vmatpush1.msra.mxu0 0.0
    %490 = vmatprep.subr.mxu0 0.0
    %491 = vmatpush1.msra.mxu0 0.0
    %492 = vmatprep.subr.mxu0 0.0
    %493 = vmatpush1.msra.mxu0 0.0
    %494 = vmatprep.subr.mxu0 0.0
    %495 = vmatpush1.msra.mxu0 0.0
    %496 = vmatprep.subr.mxu0 0.0
    %497 = vmatpush1.msra.mxu0 0.0
    %498 = vmatprep.subr.mxu0 0.0
    %499 = vmatpush1.msra.mxu0 0.0
    %500 = vmatprep.mubr.f32.mxu0 0.0
    %501 = vmatmul.mubr.f32.gmra.mrb[0].mxu0 %v431
    %v502 = vpop.f32.mrb[0].mxu0
    %v503 = vadd.f32 %v422, %v502
    %v504 = vpop.f32.mrb[0].mxu0
    %v505 = vadd.f32 %v422, %v504
    %506 = vmatprep.mubr.f32.mxu0 0.0
    %507 = vmatmul.mubr.f32.gmra.mrb[0].mxu0 %v434
    %v508 = vpop.f32.mrb[0].mxu0
    %v509 = vadd.f32 %v427, %v508
    %v510 = vpop.f32.mrb[0].mxu0
    %v511 = vadd.f32 %v427, %v510
    %512 = vdwg.mxu0
    %513 = vmatprep.subr.mxu0 %v411
    %514 = vmatpush1.msra.mxu0 %v410
    %515 = vmatprep.subr.mxu0 %v415
    %516 = vmatpush1.msra.mxu0 %v414
    %517 = vmatprep.subr.mxu0 %v419
    %518 = vmatpush1.msra.mxu0 %v418
    %519 = vmatprep.subr.mxu0 0.0
    %520 = vmatpush1.msra.mxu0 0.0
    %521 = vmatprep.subr.mxu0 0.0
    %522 = vmatpush1.msra.mxu0 0.0
    %523 = vmatprep.subr.mxu0 0.0
    %524 = vmatpush1.msra.mxu0 0.0
    %525 = vmatprep.subr.mxu0 0.0
    %526 = vmatpush1.msra.mxu0 0.0
    %527 = vmatprep.subr.mxu0 0.0
    %528 = vmatpush1.msra.mxu0 0.0
    %529 = vmatprep.subr.mxu0 0.0
    %530 = vmatpush1.msra.mxu0 0.0
    %531 = vmatprep.subr.mxu0 0.0
    %532 = vmatpush1.msra.mxu0 0.0
    %533 = vmatprep.subr.mxu0 0.0
    %534 = vmatpush1.msra.mxu0 0.0
    %535 = vmatprep.subr.mxu0 0.0
    %536 = vmatpush1.msra.mxu0 0.0
    %537 = vmatprep.subr.mxu0 0.0
    %538 = vmatpush1.msra.mxu0 0.0
    %539 = vmatprep.subr.mxu0 0.0
    %540 = vmatpush1.msra.mxu0 0.0
    %541 = vmatprep.subr.mxu0 0.0
    %542 = vmatpush1.msra.mxu0 0.0
    %543 = vmatprep.subr.mxu0 0.0
    %544 = vmatpush1.msra.mxu0 0.0
    %545 = vmatprep.subr.mxu0 0.0
    %546 = vmatpush1.msra.mxu0 0.0
    %547 = vmatprep.subr.mxu0 0.0
    %548 = vmatpush1.msra.mxu0 0.0
    %549 = vmatprep.subr.mxu0 0.0
    %550 = vmatpush1.msra.mxu0 0.0
    %551 = vmatprep.subr.mxu0 0.0
    %552 = vmatpush1.msra.mxu0 0.0
    %553 = vmatprep.subr.mxu0 0.0
    %554 = vmatpush1.msra.mxu0 0.0
    %555 = vmatprep.subr.mxu0 0.0
    %556 = vmatpush1.msra.mxu0 0.0
    %557 = vmatprep.subr.mxu0 0.0
    %558 = vmatpush1.msra.mxu0 0.0
    %559 = vmatprep.subr.mxu0 0.0
    %560 = vmatpush1.msra.mxu0 0.0
    %561 = vmatprep.subr.mxu0 0.0
    %562 = vmatpush1.msra.mxu0 0.0
    %563 = vmatprep.subr.mxu0 0.0
    %564 = vmatpush1.msra.mxu0 0.0
    %565 = vmatprep.subr.mxu0 0.0
    %566 = vmatpush1.msra.mxu0 0.0
    %567 = vmatprep.subr.mxu0 0.0
    %568 = vmatpush1.msra.mxu0 0.0
    %569 = vmatprep.subr.mxu0 0.0
    %570 = vmatpush1.msra.mxu0 0.0
    %571 = vmatprep.subr.mxu0 0.0
    %572 = vmatpush1.msra.mxu0 0.0
    %573 = vmatprep.subr.mxu0 0.0
    %574 = vmatpush1.msra.mxu0 0.0
    %575 = vmatprep.subr.mxu0 0.0
    %576 = vmatpush1.msra.mxu0 0.0
    %577 = vmatprep.mubr.f32.mxu0 0.0
    %578 = vmatmul.mubr.f32.gmra.mrb[0].mxu0 %v431
    %v579 = vpop.f32.mrb[0].mxu0
    %v580 = vadd.f32 %v422, %v579
    %v581 = vpop.f32.mrb[0].mxu0
    %v582 = vadd.f32 %v422, %v581
    %583 = vmatprep.mubr.f32.mxu0 0.0
    %584 = vmatmul.mubr.f32.gmra.mrb[0].mxu0 %v434
    %v585 = vpop.f32.mrb[0].mxu0
    %v586 = vadd.f32 %v427, %v585
    %v587 = vpop.f32.mrb[0].mxu0
    %v588 = vadd.f32 %v427, %v587
    %589 = vdwg.mxu0
    %v590 = vmul.f32 %v503, 0.5
    %v591 = vmul.f32 %v505, 0.5
    %v592 = vmul.f32 %v580, 0.5
    %v593 = vmul.f32 %v582, 0.5
    %v594 = vmul.f32 %v509, 0.5
    %v595 = vmul.f32 %v511, 0.5
    %v596 = vmul.f32 %v586, 0.5
    %v597 = vmul.f32 %v588, 0.5
    %v598 = vtanh.pop %v590
    %v599 = vtanh.pop %v591
    %v600 = vtanh.pop %v592
    %v601 = vtanh.pop %v593
    %v602 = vtanh.pop %v594
    %v603 = vtanh.pop %v595
    %v604 = vtanh.pop %v596
    %v605 = vtanh.pop %v597
    %v606 = vmul.f32 %v598, 0.5
    %v607 = vmul.f32 %v599, 0.5
    %v608 = vmul.f32 %v600, 0.5
    %v609 = vmul.f32 %v601, 0.5
    %v610 = vmul.f32 %v602, 0.5
    %v611 = vmul.f32 %v603, 0.5
    %v612 = vmul.f32 %v604, 0.5
    %v613 = vmul.f32 %v605, 0.5
    %v614 = vadd.f32 %v606, 0.5
    %v615 = vadd.f32 %v607, 0.5
    %v616 = vadd.f32 %v608, 0.5
    %v617 = vadd.f32 %v609, 0.5
    %v618 = vadd.f32 %v610, 0.5
    %v619 = vadd.f32 %v611, 0.5
    %v620 = vadd.f32 %v612, 0.5
    %v621 = vadd.f32 %v613, 0.5
    %622 = vset.pattern.permute.xlu0 36
    %623 = vperm.xlu0 %622, %v25
    %v624 = vpop.permute.xlu0 %623
    %626 = vset.pattern.permute.xlu0 36
    %627 = vperm.xlu0 %626, %v31
    %v628 = vpop.permute.xlu0 %627
    %v630 = vmul.f32 %v624, %v614
    %v631 = vmul.f32 %v624, %v615
    %v632 = vmul.f32 %v624, %v616
    %v633 = vmul.f32 %v624, %v617
    %v634 = vmul.f32 %v628, %v618
    %v635 = vmul.f32 %v628, %v619
    %v636 = vmul.f32 %v628, %v620
    %v637 = vmul.f32 %v628, %v621
    %vm638 = vcmask 1043456
    %v639 = vsel %vm638, %v634, 0.0
    %v640 = vadd.f32 %v630, %v639
    %v641 = vrot.slane %v640, 4
    %v642 = vadd.f32 %v640, %v641
    %v643 = vrot.slane %v642, 2
    %v644 = vadd.f32 %v642, %v643
    %v645 = vrot.slane %v644, 1
    %v646 = vadd.f32 %v644, %v645
    %v647 = vsel %vm638, %v635, 0.0
    %v648 = vadd.f32 %v631, %v647
    %v649 = vrot.slane %v648, 4
    %v650 = vadd.f32 %v648, %v649
    %v651 = vrot.slane %v650, 2
    %v652 = vadd.f32 %v650, %v651
    %v653 = vrot.slane %v652, 1
    %v654 = vadd.f32 %v652, %v653
    %v655 = vsel %vm638, %v636, 0.0
    %v656 = vadd.f32 %v632, %v655
    %v657 = vrot.slane %v656, 4
    %v658 = vadd.f32 %v656, %v657
    %v659 = vrot.slane %v658, 2
    %v660 = vadd.f32 %v658, %v659
    %v661 = vrot.slane %v660, 1
    %v662 = vadd.f32 %v660, %v661
    %v663 = vsel %vm638, %v637, 0.0
    %v664 = vadd.f32 %v633, %v663
    %v665 = vrot.slane %v664, 4
    %v666 = vadd.f32 %v664, %v665
    %v667 = vrot.slane %v666, 2
    %v668 = vadd.f32 %v666, %v667
    %v669 = vrot.slane %v668, 1
    %v670 = vadd.f32 %v668, %v669
    %672 = vset.pattern.permute.xlu0 37
    %673 = vperm.xlu0 %672, %v32
    %v674 = vpop.permute.xlu0 %673
    %v676 = vadd.f32 %v646, %v674
    %v677 = vadd.f32 %v654, %v674
    %v678 = vadd.f32 %v662, %v674
    %v679 = vadd.f32 %v670, %v674
    %v684 = vcombine.low %v676, %v677
    %v685 = vcombine.low %v678, %v679
    %v687 = vunpack.c.l.s4 1966171168
    %v688 = vunpack.c.0.s8 %v687
    %v689 = vlaneseq
    %v690 = vshrl.u32 %v689, 7
    %v691 = vsub.s32 %v688, %v690
    %v692 = vrot.slane %v684, %v691
    %v694 = vunpack.c.l.s4 1966171168
    %v695 = vunpack.c.0.s8 %v694
    %v696 = vlaneseq
    %v697 = vshrl.u32 %v696, 7
    %v698 = vsub.s32 %v695, %v697
    %v699 = vrot.slane %v685, %v698
    %v700 = vcombine.low %v692, %v699
    %v702 = vunpack.c.l.s4 1966171168
    %v703 = vunpack.c.0.s8 %v702
    %v704 = vlaneseq
    %v705 = vshrl.u32 %v704, 7
    %v706 = vsub.s32 %v703, %v705
    %v707 = vrot.slane %v700, %v706
    %v709 = vlaneseq
    %vm710 = vcmp.ge.s32.totalorder %v709, 0
    %vm711 = vcmp.lt.s32.totalorder %v709, 512
    %vm712 = vmand %vm710, %vm711
    %713 = vst.msk [vmem:[%s2] sm:$0xf] %vm712, %v707
    // Predicated region
    $region14: #{mlp_forward.1} parent=1 // pred_check
      _
    $region15: #{mlp_forward.1} parent=1 // pred_check_branch
      %715 = sbr.rel (0) target = $region17
    $region16: #{mlp_forward.1} parent=1 // pred_region
      _
    $region17: #{mlp_forward.1} parent=1 // pred_fallthru
      _
    // Predicated region
    $region18: #{mlp_forward.1} parent=1 // pred_check
      _
    $region19: #{mlp_forward.1} parent=1 // pred_check_branch
      %717 = sbr.rel (0) target = $region21
    $region20: #{mlp_forward.1} parent=1 // pred_region
      _
    $region21: #{mlp_forward.1} parent=1 // pred_fallthru
      _
    %718 = vsyncpa [#allocation3], 1

</llo_original>
